<compile_context>
chip_gen: v7x
topology: tpu7x:2x2x1
jax: 0.10.0
libtpu: 0.0.40
codegen_flags: <defaults>
</compile_context>

<pallas_src>
import functools

import numpy as np
import jax
import jax.numpy as jnp
from jax.experimental import pallas as pl
from jax.experimental.pallas import tpu as pltpu


@functools.lru_cache(maxsize=None)
def make_dct_matrix(N):
    """Build D (N, N) s.t. y = x @ D.T reproduces the module's 1-D DCT stage."""
    k = -np.arange(N, dtype=np.float64)[None, :] * np.pi / (2 * N)
    W_r = np.cos(k)[0]                                  # (N,)
    W_i = np.sin(k)[0]                                  # (N,)
    index = np.arange(0, N, 2)                          # even indices
    inverted_index = np.arange(N - 1, 0, -2)            # reversed odd indices
    perm = np.concatenate([index, inverted_index])      # v[j] = x[perm[j]]

    j = np.arange(N)[:, None]
    kk = np.arange(N)[None, :]
    cosF = np.cos(2.0 * np.pi * j * kk / N)             #  Re(e^{-2*pi*i*j*k/N})
    sinF = np.sin(2.0 * np.pi * j * kk / N)             # -Im(e^{-2*pi*i*j*k/N})

    # raw_V[k] = Re(FFT(v))[k]*W_r[k] - Im(FFT(v))[k]*W_i[k]
    A = cosF * W_r[None, :] + sinF * W_i[None, :]       # (j, k)

    # Undo the permutation: raw_V[k] = sum_n x[n] * M[n, k]
    M = np.zeros((N, N), dtype=np.float64)
    M[perm, :] = A

    # norm='ortho' scaling, then the final V = 2 * V
    scale = np.full(N, 1.0 / (np.sqrt(N / 2.0) * 2.0))
    scale[0] = 1.0 / (np.sqrt(N) * 2.0)
    M = M * scale[None, :] * 2.0

    return np.ascontiguousarray(M.T).astype(np.float32)  # D[k, n]


def dct2d_kernel(x_ref, dh_ref, dwt_ref, o_ref):
    """x_ref: (T, H, W); dh_ref: (H, H) = D_h; dwt_ref: (W, W) = D_w^T."""
    T, H, W = x_ref.shape
    x = x_ref[...]

    # Width-side DCT, flattened over all T*H rows -> one big MXU matmul.
    tmp = jnp.dot(
        x.reshape(T * H, W), dwt_ref[...],
        preferred_element_type=jnp.float32,
    ).reshape(T, H, W)

    # Height-side DCT as a batched matmul: out[t] = D_h @ tmp[t].
    dh_b = jnp.broadcast_to(dh_ref[...], (T, H, H))
    o_ref[...] = jnp.einsum(
        'thk,tkw->thw', dh_b, tmp, preferred_element_type=jnp.float32
    )


def _choose_block(bc, h, w, max_block_bytes=4 * 1024 * 1024):
    """Largest divisor T of bc with T*H*W*4 <= max_block_bytes."""
    plane_bytes = h * w * 4
    t = max(1, min(bc, max_block_bytes // plane_bytes))
    while bc % t:
        t -= 1
    return int(t)


@jax.jit
def dct2d(x):
    """x: (B, C, H, W) float -> (B, C, H, W) float32, 2-D DCT-II (ortho)."""
    B, C, H, W = x.shape
    BC = B * C
    T = _choose_block(BC, H, W)

    xf = x.reshape(BC, H, W).astype(jnp.float32)
    Dh = jnp.asarray(make_dct_matrix(H))          # (H, H)
    DwT = jnp.asarray(make_dct_matrix(W).T)       # (W, W)

    block_bytes = T * H * W * 4
    # in + out double-buffered (4 blocks) + intermediate (~1 block) + matrices
    # + headroom; clamp up to a safe floor (well under v7x's 32 MiB scoped).
    vmem_limit = 5 * block_bytes + 2 * (H * H + W * W) * 4 + (4 << 20)
    vmem_limit = int(max(vmem_limit, 16 * 1024 * 1024))

    out = pl.pallas_call(
        dct2d_kernel,
        out_shape=jax.ShapeDtypeStruct((BC, H, W), jnp.float32),
        grid_spec=pltpu.PrefetchScalarGridSpec(
            num_scalar_prefetch=0,
            grid=(BC // T,),
            in_specs=[
                pl.BlockSpec((T, H, W), lambda i: (i, 0, 0)),
                pl.BlockSpec((H, H), lambda i: (0, 0)),   # resident
                pl.BlockSpec((W, W), lambda i: (0, 0)),   # resident
            ],
            out_specs=pl.BlockSpec((T, H, W), lambda i: (i, 0, 0)),
        ),
        compiler_params=pltpu.CompilerParams(
            dimension_semantics=("parallel",),
            vmem_limit_bytes=vmem_limit,
        ),
    )(xf, Dh, DwT)
    return out.reshape(B, C, H, W)


def _reference_dct2d(x):
    """Pure-JAX reference mirroring the PyTorch FFT-based forward pass."""
    def dct1d(x2d):
        N = x2d.shape[-1]
        v = jnp.concatenate(
            [x2d[:, 0::2], x2d[:, N - 1:0:-2]], axis=1).astype(jnp.float32)
        Vc = jnp.fft.fft(v, axis=1)
        k = -jnp.arange(N, dtype=jnp.float32)[None, :] * jnp.pi / (2 * N)
        V = jnp.real(Vc) * jnp.cos(k) - jnp.imag(Vc) * jnp.sin(k)
        scale = jnp.full((N,), 1.0 / (np.sqrt(N / 2.0) * 2.0), jnp.float32)
        scale = scale.at[0].set(1.0 / (np.sqrt(N) * 2.0))
        return 2.0 * V * scale[None, :]

    B, C, H, W = x.shape
    y = dct1d(x.reshape(-1, W)).reshape(B, C, H, W)
    y = jnp.swapaxes(y, -1, -2)
    y = dct1d(y.reshape(-1, H)).reshape(B, C, W, H)
    return jnp.swapaxes(y, -1, -2)


if __name__ == "__main__":
    key = jax.random.PRNGKey(0)
    x = jax.random.normal(key, (2, 4, 16, 16), dtype=jnp.float32)

    out = jax.block_until_ready(dct2d(x))
    ref = jax.block_until_ready(_reference_dct2d(x))

    np.testing.assert_allclose(np.asarray(out), np.asarray(ref),
                               rtol=1e-3, atol=1e-3)
    print("KERNEL_OK")
</pallas_src>

<mosaic_0001>
module attributes {stable_mosaic.version = 11 : i64} {
  func.func @dct2d_kernel(%arg0: i32, %arg1: memref<8x16x16xf32, #tpu.memory_space<vmem>>, %arg2: memref<16x16xf32, #tpu.memory_space<vmem>>, %arg3: memref<16x16xf32, #tpu.memory_space<vmem>>, %arg4: memref<8x16x16xf32, #tpu.memory_space<vmem>>) attributes {dimension_semantics = [#tpu.dimension_semantics<parallel>], iteration_bounds = array<i64: 1>, scalar_prefetch = 0 : i64, scratch_operands = 0 : i64, tpu.core_type = #tpu.core_type<tc>, window_params = [{transform_indices = @transform_0, window_bounds = array<i64: 8, 16, 16>}, {pipeline_mode = #tpu.pipeline_mode<synchronous>, transform_indices = @transform_1, window_bounds = array<i64: 16, 16>}, {pipeline_mode = #tpu.pipeline_mode<synchronous>, transform_indices = @transform_2, window_bounds = array<i64: 16, 16>}, {transform_indices = @transform_3, window_bounds = array<i64: 8, 16, 16>}]} {
    %c0 = arith.constant 0 : index
    %c0_0 = arith.constant 0 : index
    %c0_1 = arith.constant 0 : index
    %0 = vector.load %arg1[%c0, %c0_0, %c0_1] : memref<8x16x16xf32, #tpu.memory_space<vmem>>, vector<8x16x16xf32>
    %1 = vector.shape_cast %0 : vector<8x16x16xf32> to vector<128x16xf32>
    %c0_2 = arith.constant 0 : index
    %c0_3 = arith.constant 0 : index
    %2 = vector.load %arg3[%c0_2, %c0_3] : memref<16x16xf32, #tpu.memory_space<vmem>>, vector<16x16xf32>
    %cst = arith.constant dense<0.000000e+00> : vector<128x16xf32>
    %3 = tpu.matmul %1, %2, %cst {dimension_numbers = #tpu.dot_dimension_numbers<[1], [0], [0], [1], [0, 0, 1, 1], [], []>} : vector<128x16xf32>, vector<16x16xf32>, vector<128x16xf32> -> vector<128x16xf32>
    %4 = vector.shape_cast %3 : vector<128x16xf32> to vector<8x16x16xf32>
    %c0_4 = arith.constant 0 : index
    %c0_5 = arith.constant 0 : index
    %5 = vector.load %arg2[%c0_4, %c0_5] : memref<16x16xf32, #tpu.memory_space<vmem>>, vector<16x16xf32>
    %6 = vector.shape_cast %5 : vector<16x16xf32> to vector<1x16x16xf32>
    %7 = vector.broadcast %6 : vector<1x16x16xf32> to vector<8x16x16xf32>
    "tpu.trace_start"() <{level = 10 : i32, message = "thk,tkw->thw"}> : () -> ()
    %cst_6 = arith.constant dense<0.000000e+00> : vector<8x16x16xf32>
    %8 = tpu.matmul %7, %4, %cst_6 {dimension_numbers = #tpu.dot_dimension_numbers<[2], [1], [1], [2], [0, 0, 0, 1, 1, 2], [0], [0]>} : vector<8x16x16xf32>, vector<8x16x16xf32>, vector<8x16x16xf32> -> vector<8x16x16xf32>
    "tpu.trace_stop"() : () -> ()
    %c0_7 = arith.constant 0 : index
    %c0_8 = arith.constant 0 : index
    %c0_9 = arith.constant 0 : index
    %9 = vector.load %arg4[%c0_7, %c0_8, %c0_9] : memref<8x16x16xf32, #tpu.memory_space<vmem>>, vector<8x16x16xf32>
    tpu.vector_store %arg4[%c0_7, %c0_8, %c0_9], %8 {strides = array<i32>} : memref<8x16x16xf32, #tpu.memory_space<vmem>>, vector<8x16x16xf32>,
    return
  }
  func.func @transform_0(%arg0: i32) -> (i32, i32, i32) {
    %c0_i32 = arith.constant 0 : i32
    %c0_i32_0 = arith.constant 0 : i32
    %c0_i32_1 = arith.constant 0 : i32
    return %arg0, %c0_i32, %c0_i32_0 : i32, i32, i32
  }
  func.func @transform_1(%arg0: i32) -> (i32, i32) {
    %c0_i32 = arith.constant 0 : i32
    %c0_i32_0 = arith.constant 0 : i32
    %c0_i32_1 = arith.constant 0 : i32
    return %c0_i32, %c0_i32_0 : i32, i32
  }
  func.func @transform_2(%arg0: i32) -> (i32, i32) {
    %c0_i32 = arith.constant 0 : i32
    %c0_i32_0 = arith.constant 0 : i32
    %c0_i32_1 = arith.constant 0 : i32
    return %c0_i32, %c0_i32_0 : i32, i32
  }
  func.func @transform_3(%arg0: i32) -> (i32, i32, i32) {
    %c0_i32 = arith.constant 0 : i32
    %c0_i32_0 = arith.constant 0 : i32
    %c0_i32_1 = arith.constant 0 : i32
    return %arg0, %c0_i32, %c0_i32_0 : i32, i32, i32
  }
}

</mosaic_0001>

<llo_original>
// kernel: dct2d.1
$region0: #{dct2d.1}
  #allocation0 [shape = 'u32[]', space=smem, size = 0x4, offset = 0x4, fixed_abs, tag = 'smem constant byte address 0x4 - core index']
  #allocation1 [shape = 'u32[144,128]{1,0:T(1,128)}', space=vmem, size = 0x12000, scoped, tag = 'internal scratch']
  %s0 = inlined_call_operand.hbm [shape: f32[8,16,16], index: 0, kind: input, shape index: {}]
  %s1 = inlined_call_operand.hbm [shape: f32[16,16], index: 1, kind: input, shape index: {}]
  %s2 = inlined_call_operand.hbm [shape: f32[16,16], index: 2, kind: input, shape index: {}]
  %s3 = inlined_call_operand.hbm [shape: f32[8,16,16], index: 3, kind: output, shape index: {}]
  %s4 = sld [smem:[#allocation0]]
  $region34: #{dct2d.1} parent=0
    _
  %s6 = ssub.s32 1, %s4
  %s7 = scalar_select 0, %s6, %s4
  $region1: #{dct2d.1} parent=0
    #allocation2 [shape = 'u8[65536]{0}', space=vmem, size = 0x10000, scoped, tag = 'input window, operand 0, single buffered']
    #allocation3 [shape = 's32[1]{0}', space=sflag, size = 0x4, scoped, tag = 'scoped memory for dct2d.1']
    #allocation4 [shape = 's32[1]{0}', space=sflag, size = 0x4, scoped, tag = 'scoped memory for dct2d.1']
    #allocation5 [shape = 'u8[8192]{0}', space=vmem, size = 0x2000, scoped, tag = 'input window, operand 1, single buffered']
    #allocation6 [shape = 's32[1]{0}', space=sflag, size = 0x4, scoped, tag = 'scoped memory for dct2d.1']
    #allocation7 [shape = 'u8[8192]{0}', space=vmem, size = 0x2000, scoped, tag = 'input window, operand 2, single buffered']
    #allocation8 [shape = 'u8[65536]{0}', space=vmem, size = 0x10000, scoped, tag = 'output window, operand 0, single buffered']
    %8 = vsyncpa [#allocation3], 0
    %9 = vsyncpa [#allocation6], 0
    %10 = vsyncpa [#allocation4], 0
    // Predicated region
    $region2: #{dct2d.1} parent=1 // pred_check
      _
    $region3: #{dct2d.1} parent=1 // pred_check_branch
      %12 = sbr.rel (0) target = $region5
    $region4: #{dct2d.1} parent=1 // pred_region
      %s14 = ssub.s32 2048, 2048
      %15 = vsyncadd [#allocation3], %s14
      %s16 = sshll.u32 [#allocation2], 4
      %s17 = int_to_ptr.vmem [resolvable:$true] %s16
      %22 = dma.hbm_to_vmem [thread:$0]  %s0, 2048, %s17, [#allocation3], 128, 128, 8
    $region5: #{dct2d.1} parent=1 // pred_fallthru
      _
    // Predicated region
    $region6: #{dct2d.1} parent=1 // pred_check
      _
    $region7: #{dct2d.1} parent=1 // pred_check_branch
      %24 = sbr.rel (0) target = $region9
    $region8: #{dct2d.1} parent=1 // pred_region
      %s26 = ssub.s32 256, 256
      %27 = vsyncadd [#allocation6], %s26
      %s28 = sshll.u32 [#allocation5], 4
      %s29 = int_to_ptr.vmem [resolvable:$true] %s28
      %34 = dma.hbm_to_vmem [thread:$0]  %s1, 256, %s29, [#allocation6], 128, 128, 8
    $region9: #{dct2d.1} parent=1 // pred_fallthru
      _
    // Predicated region
    $region10: #{dct2d.1} parent=1 // pred_check
      _
    $region11: #{dct2d.1} parent=1 // pred_check_branch
      %36 = sbr.rel (0) target = $region13
    $region12: #{dct2d.1} parent=1 // pred_region
      %s38 = ssub.s32 256, 256
      %39 = vsyncadd [#allocation6], %s38
      %s40 = sshll.u32 [#allocation7], 4
      %s41 = int_to_ptr.vmem [resolvable:$true] %s40
      %46 = dma.hbm_to_vmem [thread:$0]  %s2, 256, %s41, [#allocation6], 128, 128, 8
    $region13: #{dct2d.1} parent=1 // pred_fallthru
      _
    // Predicated region
    $region14: #{dct2d.1} parent=1 // pred_check
      _
    $region15: #{dct2d.1} parent=1 // pred_check_branch
      %48 = sbr.rel (0) target = $region17
    $region16: #{dct2d.1} parent=1 // pred_region
      %49 = dma.done [#allocation3], 2048
    $region17: #{dct2d.1} parent=1 // pred_fallthru
      _
    // Predicated region
    $region18: #{dct2d.1} parent=1 // pred_check
      _
    $region19: #{dct2d.1} parent=1 // pred_check_branch
      %51 = sbr.rel (0) target = $region21
    $region20: #{dct2d.1} parent=1 // pred_region
      %52 = dma.done [#allocation6], 256
    $region21: #{dct2d.1} parent=1 // pred_fallthru
      _
    // Predicated region
    $region22: #{dct2d.1} parent=1 // pred_check
      _
    $region23: #{dct2d.1} parent=1 // pred_check_branch
      %54 = sbr.rel (0) target = $region25
    $region24: #{dct2d.1} parent=1 // pred_region
      %55 = dma.done [#allocation6], 256
    $region25: #{dct2d.1} parent=1 // pred_fallthru
      _
    %v56 = vld [vmem:[#allocation2] sm:$0xff]
    %v57 = vld [vmem:[#allocation2 + $0x8] sm:$0xff]
    %v58 = vld [vmem:[#allocation2 + $0x10] sm:$0xff]
    %v59 = vld [vmem:[#allocation2 + $0x18] sm:$0xff]
    %v60 = vld [vmem:[#allocation2 + $0x20] sm:$0xff]
    %v61 = vld [vmem:[#allocation2 + $0x28] sm:$0xff]
    %v62 = vld [vmem:[#allocation2 + $0x30] sm:$0xff]
    %v63 = vld [vmem:[#allocation2 + $0x38] sm:$0xff]
    %v64 = vld [vmem:[#allocation2 + $0x40] sm:$0xff]
    %v65 = vld [vmem:[#allocation2 + $0x48] sm:$0xff]
    %v66 = vld [vmem:[#allocation2 + $0x50] sm:$0xff]
    %v67 = vld [vmem:[#allocation2 + $0x58] sm:$0xff]
    %v68 = vld [vmem:[#allocation2 + $0x60] sm:$0xff]
    %v69 = vld [vmem:[#allocation2 + $0x68] sm:$0xff]
    %v70 = vld [vmem:[#allocation2 + $0x70] sm:$0xff]
    %v71 = vld [vmem:[#allocation2 + $0x78] sm:$0xff]
    %v72 = vld [vmem:[#allocation7] sm:$0xff]
    %v73 = vld [vmem:[#allocation7 + $0x8] sm:$0xff]
    %vm74 = vcmask 130048
    %v76 = vsel %vm74, %v56, 0
    %v79 = vsel %vm74, %v57, 0
    %v82 = vsel %vm74, %v58, 0
    %v85 = vsel %vm74, %v59, 0
    %v88 = vsel %vm74, %v60, 0
    %v91 = vsel %vm74, %v61, 0
    %v94 = vsel %vm74, %v62, 0
    %v97 = vsel %vm74, %v63, 0
    %v100 = vsel %vm74, %v64, 0
    %v103 = vsel %vm74, %v65, 0
    %v106 = vsel %vm74, %v66, 0
    %v109 = vsel %vm74, %v67, 0
    %v112 = vsel %vm74, %v68, 0
    %v115 = vsel %vm74, %v69, 0
    %v118 = vsel %vm74, %v70, 0
    %v121 = vsel %vm74, %v71, 0
    %123 = vmatprep.subr.mxu0 0.0
    %124 = vmatpush1.msra.mxu0 %v72
    %125 = vmatprep.subr.mxu0 0.0
    %126 = vmatpush1.msra.mxu0 %v73
    %127 = vmatprep.subr.mxu0 0.0
    %128 = vmatpush1.msra.mxu0 0.0
    %129 = vmatprep.subr.mxu0 0.0
    %130 = vmatpush1.msra.mxu0 0.0
    %131 = vmatprep.subr.mxu0 0.0
    %132 = vmatpush1.msra.mxu0 0.0
    %133 = vmatprep.subr.mxu0 0.0
    %134 = vmatpush1.msra.mxu0 0.0
    %135 = vmatprep.subr.mxu0 0.0
    %136 = vmatpush1.msra.mxu0 0.0
    %137 = vmatprep.subr.mxu0 0.0
    %138 = vmatpush1.msra.mxu0 0.0
    %139 = vmatprep.subr.mxu0 0.0
    %140 = vmatpush1.msra.mxu0 0.0
    %141 = vmatprep.subr.mxu0 0.0
    %142 = vmatpush1.msra.mxu0 0.0
    %143 = vmatprep.subr.mxu0 0.0
    %144 = vmatpush1.msra.mxu0 0.0
    %145 = vmatprep.subr.mxu0 0.0
    %146 = vmatpush1.msra.mxu0 0.0
    %147 = vmatprep.subr.mxu0 0.0
    %148 = vmatpush1.msra.mxu0 0.0
    %149 = vmatprep.subr.mxu0 0.0
    %150 = vmatpush1.msra.mxu0 0.0
    %151 = vmatprep.subr.mxu0 0.0
    %152 = vmatpush1.msra.mxu0 0.0
    %153 = vmatprep.subr.mxu0 0.0
    %154 = vmatpush1.msra.mxu0 0.0
    %155 = vmatprep.subr.mxu0 0.0
    %156 = vmatpush1.msra.mxu0 0.0
    %157 = vmatprep.subr.mxu0 0.0
    %158 = vmatpush1.msra.mxu0 0.0
    %159 = vmatprep.subr.mxu0 0.0
    %160 = vmatpush1.msra.mxu0 0.0
    %161 = vmatprep.subr.mxu0 0.0
    %162 = vmatpush1.msra.mxu0 0.0
    %163 = vmatprep.subr.mxu0 0.0
    %164 = vmatpush1.msra.mxu0 0.0
    %165 = vmatprep.subr.mxu0 0.0
    %166 = vmatpush1.msra.mxu0 0.0
    %167 = vmatprep.subr.mxu0 0.0
    %168 = vmatpush1.msra.mxu0 0.0
    %169 = vmatprep.subr.mxu0 0.0
    %170 = vmatpush1.msra.mxu0 0.0
    %171 = vmatprep.subr.mxu0 0.0
    %172 = vmatpush1.msra.mxu0 0.0
    %173 = vmatprep.subr.mxu0 0.0
    %174 = vmatpush1.msra.mxu0 0.0
    %175 = vmatprep.subr.mxu0 0.0
    %176 = vmatpush1.msra.mxu0 0.0
    %177 = vmatprep.subr.mxu0 0.0
    %178 = vmatpush1.msra.mxu0 0.0
    %179 = vmatprep.subr.mxu0 0.0
    %180 = vmatpush1.msra.mxu0 0.0
    %181 = vmatprep.subr.mxu0 0.0
    %182 = vmatpush1.msra.mxu0 0.0
    %183 = vmatprep.subr.mxu0 0.0
    %184 = vmatpush1.msra.mxu0 0.0
    %185 = vmatprep.subr.mxu0 0.0
    %186 = vmatpush1.msra.mxu0 0.0
    %187 = vmatprep.mubr.f32.mxu0 0.0
    %188 = vmatmul.mubr.f32.gmra.mrb[0].mxu0 %v76
    %v189 = vpop.f32.mrb[0].mxu0
    %v190 = vadd.f32 0.0, %v189
    %v191 = vpop.f32.mrb[0].mxu0
    %192 = vmatprep.mubr.f32.mxu0 0.0
    %193 = vmatmul.mubr.f32.gmra.mrb[0].mxu0 %v79
    %v194 = vpop.f32.mrb[0].mxu0
    %v195 = vadd.f32 0.0, %v194
    %v196 = vpop.f32.mrb[0].mxu0
    %197 = vmatprep.mubr.f32.mxu0 0.0
    %198 = vmatmul.mubr.f32.gmra.mrb[0].mxu0 %v82
    %v199 = vpop.f32.mrb[0].mxu0
    %v200 = vadd.f32 0.0, %v199
    %v201 = vpop.f32.mrb[0].mxu0
    %202 = vmatprep.mubr.f32.mxu0 0.0
    %203 = vmatmul.mubr.f32.gmra.mrb[0].mxu0 %v85
    %v204 = vpop.f32.mrb[0].mxu0
    %v205 = vadd.f32 0.0, %v204
    %v206 = vpop.f32.mrb[0].mxu0
    %207 = vmatprep.mubr.f32.mxu0 0.0
    %208 = vmatmul.mubr.f32.gmra.mrb[0].mxu0 %v88
    %v209 = vpop.f32.mrb[0].mxu0
    %v210 = vadd.f32 0.0, %v209
    %v211 = vpop.f32.mrb[0].mxu0
    %212 = vmatprep.mubr.f32.mxu0 0.0
    %213 = vmatmul.mubr.f32.gmra.mrb[0].mxu0 %v91
    %v214 = vpop.f32.mrb[0].mxu0
    %v215 = vadd.f32 0.0, %v214
    %v216 = vpop.f32.mrb[0].mxu0
    %217 = vmatprep.mubr.f32.mxu0 0.0
    %218 = vmatmul.mubr.f32.gmra.mrb[0].mxu0 %v94
    %v219 = vpop.f32.mrb[0].mxu0
    %v220 = vadd.f32 0.0, %v219
    %v221 = vpop.f32.mrb[0].mxu0
    %222 = vmatprep.mubr.f32.mxu0 0.0
    %223 = vmatmul.mubr.f32.gmra.mrb[0].mxu0 %v97
    %v224 = vpop.f32.mrb[0].mxu0
    %v225 = vadd.f32 0.0, %v224
    %v226 = vpop.f32.mrb[0].mxu0
    %227 = vmatprep.mubr.f32.mxu0 0.0
    %228 = vmatmul.mubr.f32.gmra.mrb[0].mxu0 %v100
    %v229 = vpop.f32.mrb[0].mxu0
    %v230 = vadd.f32 0.0, %v229
    %v231 = vpop.f32.mrb[0].mxu0
    %232 = vmatprep.mubr.f32.mxu0 0.0
    %233 = vmatmul.mubr.f32.gmra.mrb[0].mxu0 %v103
    %v234 = vpop.f32.mrb[0].mxu0
    %v235 = vadd.f32 0.0, %v234
    %v236 = vpop.f32.mrb[0].mxu0
    %237 = vmatprep.mubr.f32.mxu0 0.0
    %238 = vmatmul.mubr.f32.gmra.mrb[0].mxu0 %v106
    %v239 = vpop.f32.mrb[0].mxu0
    %v240 = vadd.f32 0.0, %v239
    %v241 = vpop.f32.mrb[0].mxu0
    %242 = vmatprep.mubr.f32.mxu0 0.0
    %243 = vmatmul.mubr.f32.gmra.mrb[0].mxu0 %v109
    %v244 = vpop.f32.mrb[0].mxu0
    %v245 = vadd.f32 0.0, %v244
    %v246 = vpop.f32.mrb[0].mxu0
    %247 = vmatprep.mubr.f32.mxu0 0.0
    %248 = vmatmul.mubr.f32.gmra.mrb[0].mxu0 %v112
    %v249 = vpop.f32.mrb[0].mxu0
    %v250 = vadd.f32 0.0, %v249
    %v251 = vpop.f32.mrb[0].mxu0
    %252 = vmatprep.mubr.f32.mxu0 0.0
    %253 = vmatmul.mubr.f32.gmra.mrb[0].mxu0 %v115
    %v254 = vpop.f32.mrb[0].mxu0
    %v255 = vadd.f32 0.0, %v254
    %v256 = vpop.f32.mrb[0].mxu0
    %257 = vmatprep.mubr.f32.mxu0 0.0
    %258 = vmatmul.mubr.f32.gmra.mrb[0].mxu0 %v118
    %v259 = vpop.f32.mrb[0].mxu0
    %v260 = vadd.f32 0.0, %v259
    %v261 = vpop.f32.mrb[0].mxu0
    %262 = vmatprep.mubr.f32.mxu0 0.0
    %263 = vmatmul.mubr.f32.gmra.mrb[0].mxu0 %v121
    %v264 = vpop.f32.mrb[0].mxu0
    %v265 = vadd.f32 0.0, %v264
    %v266 = vpop.f32.mrb[0].mxu0
    %267 = vdwg.mxu0
    %v268 = vld [vmem:[#allocation5] sm:$0xff]
    %v269 = vld [vmem:[#allocation5 + $0x8] sm:$0xff]
    %v271 = vsel %vm74, %v268, 0
    %v274 = vsel %vm74, %v269, 0
    %276 = vmatprep.subr.mxu0 0.0
    %277 = vmatpush1.msra.mxu0 %v190
    %278 = vmatprep.subr.mxu0 0.0
    %279 = vmatpush1.msra.mxu0 %v195
    %280 = vmatprep.subr.mxu0 0.0
    %281 = vmatpush1.msra.mxu0 0.0
    %282 = vmatprep.subr.mxu0 0.0
    %283 = vmatpush1.msra.mxu0 0.0
    %284 = vmatprep.subr.mxu0 0.0
    %285 = vmatpush1.msra.mxu0 0.0
    %286 = vmatprep.subr.mxu0 0.0
    %287 = vmatpush1.msra.mxu0 0.0
    %288 = vmatprep.subr.mxu0 0.0
    %289 = vmatpush1.msra.mxu0 0.0
    %290 = vmatprep.subr.mxu0 0.0
    %291 = vmatpush1.msra.mxu0 0.0
    %292 = vmatprep.subr.mxu0 0.0
    %293 = vmatpush1.msra.mxu0 0.0
    %294 = vmatprep.subr.mxu0 0.0
    %295 = vmatpush1.msra.mxu0 0.0
    %296 = vmatprep.subr.mxu0 0.0
    %297 = vmatpush1.msra.mxu0 0.0
    %298 = vmatprep.subr.mxu0 0.0
    %299 = vmatpush1.msra.mxu0 0.0
    %300 = vmatprep.subr.mxu0 0.0
    %301 = vmatpush1.msra.mxu0 0.0
    %302 = vmatprep.subr.mxu0 0.0
    %303 = vmatpush1.msra.mxu0 0.0
    %304 = vmatprep.subr.mxu0 0.0
    %305 = vmatpush1.msra.mxu0 0.0
    %306 = vmatprep.subr.mxu0 0.0
    %307 = vmatpush1.msra.mxu0 0.0
    %308 = vmatprep.subr.mxu0 0.0
    %309 = vmatpush1.msra.mxu0 0.0
    %310 = vmatprep.subr.mxu0 0.0
    %311 = vmatpush1.msra.mxu0 0.0
    %312 = vmatprep.subr.mxu0 0.0
    %313 = vmatpush1.msra.mxu0 0.0
    %314 = vmatprep.subr.mxu0 0.0
    %315 = vmatpush1.msra.mxu0 0.0
    %316 = vmatprep.subr.mxu0 0.0
    %317 = vmatpush1.msra.mxu0 0.0
    %318 = vmatprep.subr.mxu0 0.0
    %319 = vmatpush1.msra.mxu0 0.0
    %320 = vmatprep.subr.mxu0 0.0
    %321 = vmatpush1.msra.mxu0 0.0
    %322 = vmatprep.subr.mxu0 0.0
    %323 = vmatpush1.msra.mxu0 0.0
    %324 = vmatprep.subr.mxu0 0.0
    %325 = vmatpush1.msra.mxu0 0.0
    %326 = vmatprep.subr.mxu0 0.0
    %327 = vmatpush1.msra.mxu0 0.0
    %328 = vmatprep.subr.mxu0 0.0
    %329 = vmatpush1.msra.mxu0 0.0
    %330 = vmatprep.subr.mxu0 0.0
    %331 = vmatpush1.msra.mxu0 0.0
    %332 = vmatprep.subr.mxu0 0.0
    %333 = vmatpush1.msra.mxu0 0.0
    %334 = vmatprep.subr.mxu0 0.0
    %335 = vmatpush1.msra.mxu0 0.0
    %336 = vmatprep.subr.mxu0 0.0
    %337 = vmatpush1.msra.mxu0 0.0
    %338 = vmatprep.subr.mxu0 0.0
    %339 = vmatpush1.msra.mxu0 0.0
    %340 = vmatprep.mubr.f32.mxu0 0.0
    %341 = vmatmul.mubr.f32.gmra.mrb[0].mxu0 %v271
    %v342 = vpop.f32.mrb[0].mxu0
    %v343 = vadd.f32 0.0, %v342
    %v344 = vpop.f32.mrb[0].mxu0
    %345 = vmatprep.mubr.f32.mxu0 0.0
    %346 = vmatmul.mubr.f32.gmra.mrb[0].mxu0 %v274
    %v347 = vpop.f32.mrb[0].mxu0
    %v348 = vadd.f32 0.0, %v347
    %v349 = vpop.f32.mrb[0].mxu0
    %350 = vdwg.mxu0
    %351 = vmatprep.subr.mxu0 0.0
    %352 = vmatpush1.msra.mxu0 %v200
    %353 = vmatprep.subr.mxu0 0.0
    %354 = vmatpush1.msra.mxu0 %v205
    %355 = vmatprep.subr.mxu0 0.0
    %356 = vmatpush1.msra.mxu0 0.0
    %357 = vmatprep.subr.mxu0 0.0
    %358 = vmatpush1.msra.mxu0 0.0
    %359 = vmatprep.subr.mxu0 0.0
    %360 = vmatpush1.msra.mxu0 0.0
    %361 = vmatprep.subr.mxu0 0.0
    %362 = vmatpush1.msra.mxu0 0.0
    %363 = vmatprep.subr.mxu0 0.0
    %364 = vmatpush1.msra.mxu0 0.0
    %365 = vmatprep.subr.mxu0 0.0
    %366 = vmatpush1.msra.mxu0 0.0
    %367 = vmatprep.subr.mxu0 0.0
    %368 = vmatpush1.msra.mxu0 0.0
    %369 = vmatprep.subr.mxu0 0.0
    %370 = vmatpush1.msra.mxu0 0.0
    %371 = vmatprep.subr.mxu0 0.0
    %372 = vmatpush1.msra.mxu0 0.0
    %373 = vmatprep.subr.mxu0 0.0
    %374 = vmatpush1.msra.mxu0 0.0
    %375 = vmatprep.subr.mxu0 0.0
    %376 = vmatpush1.msra.mxu0 0.0
    %377 = vmatprep.subr.mxu0 0.0
    %378 = vmatpush1.msra.mxu0 0.0
    %379 = vmatprep.subr.mxu0 0.0
    %380 = vmatpush1.msra.mxu0 0.0
    %381 = vmatprep.subr.mxu0 0.0
    %382 = vmatpush1.msra.mxu0 0.0
    %383 = vmatprep.subr.mxu0 0.0
    %384 = vmatpush1.msra.mxu0 0.0
    %385 = vmatprep.subr.mxu0 0.0
    %386 = vmatpush1.msra.mxu0 0.0
    %387 = vmatprep.subr.mxu0 0.0
    %388 = vmatpush1.msra.mxu0 0.0
    %389 = vmatprep.subr.mxu0 0.0
    %390 = vmatpush1.msra.mxu0 0.0
    %391 = vmatprep.subr.mxu0 0.0
    %392 = vmatpush1.msra.mxu0 0.0
    %393 = vmatprep.subr.mxu0 0.0
    %394 = vmatpush1.msra.mxu0 0.0
    %395 = vmatprep.subr.mxu0 0.0
    %396 = vmatpush1.msra.mxu0 0.0
    %397 = vmatprep.subr.mxu0 0.0
    %398 = vmatpush1.msra.mxu0 0.0
    %399 = vmatprep.subr.mxu0 0.0
    %400 = vmatpush1.msra.mxu0 0.0
    %401 = vmatprep.subr.mxu0 0.0
    %402 = vmatpush1.msra.mxu0 0.0
    %403 = vmatprep.subr.mxu0 0.0
    %404 = vmatpush1.msra.mxu0 0.0
    %405 = vmatprep.subr.mxu0 0.0
    %406 = vmatpush1.msra.mxu0 0.0
    %407 = vmatprep.subr.mxu0 0.0
    %408 = vmatpush1.msra.mxu0 0.0
    %409 = vmatprep.subr.mxu0 0.0
    %410 = vmatpush1.msra.mxu0 0.0
    %411 = vmatprep.subr.mxu0 0.0
    %412 = vmatpush1.msra.mxu0 0.0
    %413 = vmatprep.subr.mxu0 0.0
    %414 = vmatpush1.msra.mxu0 0.0
    %415 = vmatprep.mubr.f32.mxu0 0.0
    %416 = vmatmul.mubr.f32.gmra.mrb[0].mxu0 %v271
    %v417 = vpop.f32.mrb[0].mxu0
    %v418 = vadd.f32 0.0, %v417
    %v419 = vpop.f32.mrb[0].mxu0
    %420 = vmatprep.mubr.f32.mxu0 0.0
    %421 = vmatmul.mubr.f32.gmra.mrb[0].mxu0 %v274
    %v422 = vpop.f32.mrb[0].mxu0
    %v423 = vadd.f32 0.0, %v422
    %v424 = vpop.f32.mrb[0].mxu0
    %425 = vdwg.mxu0
    %426 = vmatprep.subr.mxu0 0.0
    %427 = vmatpush1.msra.mxu0 %v210
    %428 = vmatprep.subr.mxu0 0.0
    %429 = vmatpush1.msra.mxu0 %v215
    %430 = vmatprep.subr.mxu0 0.0
    %431 = vmatpush1.msra.mxu0 0.0
    %432 = vmatprep.subr.mxu0 0.0
    %433 = vmatpush1.msra.mxu0 0.0
    %434 = vmatprep.subr.mxu0 0.0
    %435 = vmatpush1.msra.mxu0 0.0
    %436 = vmatprep.subr.mxu0 0.0
    %437 = vmatpush1.msra.mxu0 0.0
    %438 = vmatprep.subr.mxu0 0.0
    %439 = vmatpush1.msra.mxu0 0.0
    %440 = vmatprep.subr.mxu0 0.0
    %441 = vmatpush1.msra.mxu0 0.0
    %442 = vmatprep.subr.mxu0 0.0
    %443 = vmatpush1.msra.mxu0 0.0
    %444 = vmatprep.subr.mxu0 0.0
    %445 = vmatpush1.msra.mxu0 0.0
    %446 = vmatprep.subr.mxu0 0.0
    %447 = vmatpush1.msra.mxu0 0.0
    %448 = vmatprep.subr.mxu0 0.0
    %449 = vmatpush1.msra.mxu0 0.0
    %450 = vmatprep.subr.mxu0 0.0
    %451 = vmatpush1.msra.mxu0 0.0
    %452 = vmatprep.subr.mxu0 0.0
    %453 = vmatpush1.msra.mxu0 0.0
    %454 = vmatprep.subr.mxu0 0.0
    %455 = vmatpush1.msra.mxu0 0.0
    %456 = vmatprep.subr.mxu0 0.0
    %457 = vmatpush1.msra.mxu0 0.0
    %458 = vmatprep.subr.mxu0 0.0
    %459 = vmatpush1.msra.mxu0 0.0
    %460 = vmatprep.subr.mxu0 0.0
    %461 = vmatpush1.msra.mxu0 0.0
    %462 = vmatprep.subr.mxu0 0.0
    %463 = vmatpush1.msra.mxu0 0.0
    %464 = vmatprep.subr.mxu0 0.0
    %465 = vmatpush1.msra.mxu0 0.0
    %466 = vmatprep.subr.mxu0 0.0
    %467 = vmatpush1.msra.mxu0 0.0
    %468 = vmatprep.subr.mxu0 0.0
    %469 = vmatpush1.msra.mxu0 0.0
    %470 = vmatprep.subr.mxu0 0.0
    %471 = vmatpush1.msra.mxu0 0.0
    %472 = vmatprep.subr.mxu0 0.0
    %473 = vmatpush1.msra.mxu0 0.0
    %474 = vmatprep.subr.mxu0 0.0
    %475 = vmatpush1.msra.mxu0 0.0
    %476 = vmatprep.subr.mxu0 0.0
    %477 = vmatpush1.msra.mxu0 0.0
    %478 = vmatprep.subr.mxu0 0.0
    %479 = vmatpush1.msra.mxu0 0.0
    %480 = vmatprep.subr.mxu0 0.0
    %481 = vmatpush1.msra.mxu0 0.0
    %482 = vmatprep.subr.mxu0 0.0
    %483 = vmatpush1.msra.mxu0 0.0
    %484 = vmatprep.subr.mxu0 0.0
    %485 = vmatpush1.msra.mxu0 0.0
    %486 = vmatprep.subr.mxu0 0.0
    %487 = vmatpush1.msra.mxu0 0.0
    %488 = vmatprep.subr.mxu0 0.0
    %489 = vmatpush1.msra.mxu0 0.0
    %490 = vmatprep.mubr.f32.mxu0 0.0
    %491 = vmatmul.mubr.f32.gmra.mrb[0].mxu0 %v271
    %v492 = vpop.f32.mrb[0].mxu0
    %v493 = vadd.f32 0.0, %v492
    %v494 = vpop.f32.mrb[0].mxu0
    %495 = vmatprep.mubr.f32.mxu0 0.0
    %496 = vmatmul.mubr.f32.gmra.mrb[0].mxu0 %v274
    %v497 = vpop.f32.mrb[0].mxu0
    %v498 = vadd.f32 0.0, %v497
    %v499 = vpop.f32.mrb[0].mxu0
    %500 = vdwg.mxu0
    %501 = vmatprep.subr.mxu0 0.0
    %502 = vmatpush1.msra.mxu0 %v220
    %503 = vmatprep.subr.mxu0 0.0
    %504 = vmatpush1.msra.mxu0 %v225
    %505 = vmatprep.subr.mxu0 0.0
    %506 = vmatpush1.msra.mxu0 0.0
    %507 = vmatprep.subr.mxu0 0.0
    %508 = vmatpush1.msra.mxu0 0.0
    %509 = vmatprep.subr.mxu0 0.0
    %510 = vmatpush1.msra.mxu0 0.0
    %511 = vmatprep.subr.mxu0 0.0
    %512 = vmatpush1.msra.mxu0 0.0
    %513 = vmatprep.subr.mxu0 0.0
    %514 = vmatpush1.msra.mxu0 0.0
    %515 = vmatprep.subr.mxu0 0.0
    %516 = vmatpush1.msra.mxu0 0.0
    %517 = vmatprep.subr.mxu0 0.0
    %518 = vmatpush1.msra.mxu0 0.0
    %519 = vmatprep.subr.mxu0 0.0
    %520 = vmatpush1.msra.mxu0 0.0
    %521 = vmatprep.subr.mxu0 0.0
    %522 = vmatpush1.msra.mxu0 0.0
    %523 = vmatprep.subr.mxu0 0.0
    %524 = vmatpush1.msra.mxu0 0.0
    %525 = vmatprep.subr.mxu0 0.0
    %526 = vmatpush1.msra.mxu0 0.0
    %527 = vmatprep.subr.mxu0 0.0
    %528 = vmatpush1.msra.mxu0 0.0
    %529 = vmatprep.subr.mxu0 0.0
    %530 = vmatpush1.msra.mxu0 0.0
    %531 = vmatprep.subr.mxu0 0.0
    %532 = vmatpush1.msra.mxu0 0.0
    %533 = vmatprep.subr.mxu0 0.0
    %534 = vmatpush1.msra.mxu0 0.0
    %535 = vmatprep.subr.mxu0 0.0
    %536 = vmatpush1.msra.mxu0 0.0
    %537 = vmatprep.subr.mxu0 0.0
    %538 = vmatpush1.msra.mxu0 0.0
    %539 = vmatprep.subr.mxu0 0.0
    %540 = vmatpush1.msra.mxu0 0.0
    %541 = vmatprep.subr.mxu0 0.0
    %542 = vmatpush1.msra.mxu0 0.0
    %543 = vmatprep.subr.mxu0 0.0
    %544 = vmatpush1.msra.mxu0 0.0
    %545 = vmatprep.subr.mxu0 0.0
    %546 = vmatpush1.msra.mxu0 0.0
    %547 = vmatprep.subr.mxu0 0.0
    %548 = vmatpush1.msra.mxu0 0.0
    %549 = vmatprep.subr.mxu0 0.0
    %550 = vmatpush1.msra.mxu0 0.0
    %551 = vmatprep.subr.mxu0 0.0
    %552 = vmatpush1.msra.mxu0 0.0
    %553 = vmatprep.subr.mxu0 0.0
    %554 = vmatpush1.msra.mxu0 0.0
    %555 = vmatprep.subr.mxu0 0.0
    %556 = vmatpush1.msra.mxu0 0.0
    %557 = vmatprep.subr.mxu0 0.0
    %558 = vmatpush1.msra.mxu0 0.0
    %559 = vmatprep.subr.mxu0 0.0
    %560 = vmatpush1.msra.mxu0 0.0
    %561 = vmatprep.subr.mxu0 0.0
    %562 = vmatpush1.msra.mxu0 0.0
    %563 = vmatprep.subr.mxu0 0.0
    %564 = vmatpush1.msra.mxu0 0.0
    %565 = vmatprep.mubr.f32.mxu0 0.0
    %566 = vmatmul.mubr.f32.gmra.mrb[0].mxu0 %v271
    %v567 = vpop.f32.mrb[0].mxu0
    %v568 = vadd.f32 0.0, %v567
    %v569 = vpop.f32.mrb[0].mxu0
    %570 = vmatprep.mubr.f32.mxu0 0.0
    %571 = vmatmul.mubr.f32.gmra.mrb[0].mxu0 %v274
    %v572 = vpop.f32.mrb[0].mxu0
    %v573 = vadd.f32 0.0, %v572
    %v574 = vpop.f32.mrb[0].mxu0
    %575 = vdwg.mxu0
    %576 = vmatprep.subr.mxu0 0.0
    %577 = vmatpush1.msra.mxu0 %v230
    %578 = vmatprep.subr.mxu0 0.0
    %579 = vmatpush1.msra.mxu0 %v235
    %580 = vmatprep.subr.mxu0 0.0
    %581 = vmatpush1.msra.mxu0 0.0
    %582 = vmatprep.subr.mxu0 0.0
    %583 = vmatpush1.msra.mxu0 0.0
    %584 = vmatprep.subr.mxu0 0.0
    %585 = vmatpush1.msra.mxu0 0.0
    %586 = vmatprep.subr.mxu0 0.0
    %587 = vmatpush1.msra.mxu0 0.0
    %588 = vmatprep.subr.mxu0 0.0
    %589 = vmatpush1.msra.mxu0 0.0
    %590 = vmatprep.subr.mxu0 0.0
    %591 = vmatpush1.msra.mxu0 0.0
    %592 = vmatprep.subr.mxu0 0.0
    %593 = vmatpush1.msra.mxu0 0.0
    %594 = vmatprep.subr.mxu0 0.0
    %595 = vmatpush1.msra.mxu0 0.0
    %596 = vmatprep.subr.mxu0 0.0
    %597 = vmatpush1.msra.mxu0 0.0
    %598 = vmatprep.subr.mxu0 0.0
    %599 = vmatpush1.msra.mxu0 0.0
    %600 = vmatprep.subr.mxu0 0.0
    %601 = vmatpush1.msra.mxu0 0.0
    %602 = vmatprep.subr.mxu0 0.0
    %603 = vmatpush1.msra.mxu0 0.0
    %604 = vmatprep.subr.mxu0 0.0
    %605 = vmatpush1.msra.mxu0 0.0
    %606 = vmatprep.subr.mxu0 0.0
    %607 = vmatpush1.msra.mxu0 0.0
    %608 = vmatprep.subr.mxu0 0.0
    %609 = vmatpush1.msra.mxu0 0.0
    %610 = vmatprep.subr.mxu0 0.0
    %611 = vmatpush1.msra.mxu0 0.0
    %612 = vmatprep.subr.mxu0 0.0
    %613 = vmatpush1.msra.mxu0 0.0
    %614 = vmatprep.subr.mxu0 0.0
    %615 = vmatpush1.msra.mxu0 0.0
    %616 = vmatprep.subr.mxu0 0.0
    %617 = vmatpush1.msra.mxu0 0.0
    %618 = vmatprep.subr.mxu0 0.0
    %619 = vmatpush1.msra.mxu0 0.0
    %620 = vmatprep.subr.mxu0 0.0
    %621 = vmatpush1.msra.mxu0 0.0
    %622 = vmatprep.subr.mxu0 0.0
    %623 = vmatpush1.msra.mxu0 0.0
    %624 = vmatprep.subr.mxu0 0.0
    %625 = vmatpush1.msra.mxu0 0.0
    %626 = vmatprep.subr.mxu0 0.0
    %627 = vmatpush1.msra.mxu0 0.0
    %628 = vmatprep.subr.mxu0 0.0
    %629 = vmatpush1.msra.mxu0 0.0
    %630 = vmatprep.subr.mxu0 0.0
    %631 = vmatpush1.msra.mxu0 0.0
    %632 = vmatprep.subr.mxu0 0.0
    %633 = vmatpush1.msra.mxu0 0.0
    %634 = vmatprep.subr.mxu0 0.0
    %635 = vmatpush1.msra.mxu0 0.0
    %636 = vmatprep.subr.mxu0 0.0
    %637 = vmatpush1.msra.mxu0 0.0
    %638 = vmatprep.subr.mxu0 0.0
    %639 = vmatpush1.msra.mxu0 0.0
    %640 = vmatprep.mubr.f32.mxu0 0.0
    %641 = vmatmul.mubr.f32.gmra.mrb[0].mxu0 %v271
    %v642 = vpop.f32.mrb[0].mxu0
    %v643 = vadd.f32 0.0, %v642
    %v644 = vpop.f32.mrb[0].mxu0
    %645 = vmatprep.mubr.f32.mxu0 0.0
    %646 = vmatmul.mubr.f32.gmra.mrb[0].mxu0 %v274
    %v647 = vpop.f32.mrb[0].mxu0
    %v648 = vadd.f32 0.0, %v647
    %v649 = vpop.f32.mrb[0].mxu0
    %650 = vdwg.mxu0
    %651 = vmatprep.subr.mxu0 0.0
    %652 = vmatpush1.msra.mxu0 %v240
    %653 = vmatprep.subr.mxu0 0.0
    %654 = vmatpush1.msra.mxu0 %v245
    %655 = vmatprep.subr.mxu0 0.0
    %656 = vmatpush1.msra.mxu0 0.0
    %657 = vmatprep.subr.mxu0 0.0
    %658 = vmatpush1.msra.mxu0 0.0
    %659 = vmatprep.subr.mxu0 0.0
    %660 = vmatpush1.msra.mxu0 0.0
    %661 = vmatprep.subr.mxu0 0.0
    %662 = vmatpush1.msra.mxu0 0.0
    %663 = vmatprep.subr.mxu0 0.0
    %664 = vmatpush1.msra.mxu0 0.0
    %665 = vmatprep.subr.mxu0 0.0
    %666 = vmatpush1.msra.mxu0 0.0
    %667 = vmatprep.subr.mxu0 0.0
    %668 = vmatpush1.msra.mxu0 0.0
    %669 = vmatprep.subr.mxu0 0.0
    %670 = vmatpush1.msra.mxu0 0.0
    %671 = vmatprep.subr.mxu0 0.0
    %672 = vmatpush1.msra.mxu0 0.0
    %673 = vmatprep.subr.mxu0 0.0
    %674 = vmatpush1.msra.mxu0 0.0
    %675 = vmatprep.subr.mxu0 0.0
    %676 = vmatpush1.msra.mxu0 0.0
    %677 = vmatprep.subr.mxu0 0.0
    %678 = vmatpush1.msra.mxu0 0.0
    %679 = vmatprep.subr.mxu0 0.0
    %680 = vmatpush1.msra.mxu0 0.0
    %681 = vmatprep.subr.mxu0 0.0
    %682 = vmatpush1.msra.mxu0 0.0
    %683 = vmatprep.subr.mxu0 0.0
    %684 = vmatpush1.msra.mxu0 0.0
    %685 = vmatprep.subr.mxu0 0.0
    %686 = vmatpush1.msra.mxu0 0.0
    %687 = vmatprep.subr.mxu0 0.0
    %688 = vmatpush1.msra.mxu0 0.0
    %689 = vmatprep.subr.mxu0 0.0
    %690 = vmatpush1.msra.mxu0 0.0
    %691 = vmatprep.subr.mxu0 0.0
    %692 = vmatpush1.msra.mxu0 0.0
    %693 = vmatprep.subr.mxu0 0.0
    %694 = vmatpush1.msra.mxu0 0.0
    %695 = vmatprep.subr.mxu0 0.0
    %696 = vmatpush1.msra.mxu0 0.0
    %697 = vmatprep.subr.mxu0 0.0
    %698 = vmatpush1.msra.mxu0 0.0
    %699 = vmatprep.subr.mxu0 0.0
    %700 = vmatpush1.msra.mxu0 0.0
    %701 = vmatprep.subr.mxu0 0.0
    %702 = vmatpush1.msra.mxu0 0.0
    %703 = vmatprep.subr.mxu0 0.0
    %704 = vmatpush1.msra.mxu0 0.0
    %705 = vmatprep.subr.mxu0 0.0
    %706 = vmatpush1.msra.mxu0 0.0
    %707 = vmatprep.subr.mxu0 0.0
    %708 = vmatpush1.msra.mxu0 0.0
    %709 = vmatprep.subr.mxu0 0.0
    %710 = vmatpush1.msra.mxu0 0.0
    %711 = vmatprep.subr.mxu0 0.0
    %712 = vmatpush1.msra.mxu0 0.0
    %713 = vmatprep.subr.mxu0 0.0
    %714 = vmatpush1.msra.mxu0 0.0
    %715 = vmatprep.mubr.f32.mxu0 0.0
    %716 = vmatmul.mubr.f32.gmra.mrb[0].mxu0 %v271
    %v717 = vpop.f32.mrb[0].mxu0
    %v718 = vadd.f32 0.0, %v717
    %v719 = vpop.f32.mrb[0].mxu0
    %720 = vmatprep.mubr.f32.mxu0 0.0
    %721 = vmatmul.mubr.f32.gmra.mrb[0].mxu0 %v274
    %v722 = vpop.f32.mrb[0].mxu0
    %v723 = vadd.f32 0.0, %v722
    %v724 = vpop.f32.mrb[0].mxu0
    %725 = vdwg.mxu0
    %726 = vmatprep.subr.mxu0 0.0
    %727 = vmatpush1.msra.mxu0 %v250
    %728 = vmatprep.subr.mxu0 0.0
    %729 = vmatpush1.msra.mxu0 %v255
    %730 = vmatprep.subr.mxu0 0.0
    %731 = vmatpush1.msra.mxu0 0.0
    %732 = vmatprep.subr.mxu0 0.0
    %733 = vmatpush1.msra.mxu0 0.0
    %734 = vmatprep.subr.mxu0 0.0
    %735 = vmatpush1.msra.mxu0 0.0
    %736 = vmatprep.subr.mxu0 0.0
    %737 = vmatpush1.msra.mxu0 0.0
    %738 = vmatprep.subr.mxu0 0.0
    %739 = vmatpush1.msra.mxu0 0.0
    %740 = vmatprep.subr.mxu0 0.0
    %741 = vmatpush1.msra.mxu0 0.0
    %742 = vmatprep.subr.mxu0 0.0
    %743 = vmatpush1.msra.mxu0 0.0
    %744 = vmatprep.subr.mxu0 0.0
    %745 = vmatpush1.msra.mxu0 0.0
    %746 = vmatprep.subr.mxu0 0.0
    %747 = vmatpush1.msra.mxu0 0.0
    %748 = vmatprep.subr.mxu0 0.0
    %749 = vmatpush1.msra.mxu0 0.0
    %750 = vmatprep.subr.mxu0 0.0
    %751 = vmatpush1.msra.mxu0 0.0
    %752 = vmatprep.subr.mxu0 0.0
    %753 = vmatpush1.msra.mxu0 0.0
    %754 = vmatprep.subr.mxu0 0.0
    %755 = vmatpush1.msra.mxu0 0.0
    %756 = vmatprep.subr.mxu0 0.0
    %757 = vmatpush1.msra.mxu0 0.0
    %758 = vmatprep.subr.mxu0 0.0
    %759 = vmatpush1.msra.mxu0 0.0
    %760 = vmatprep.subr.mxu0 0.0
    %761 = vmatpush1.msra.mxu0 0.0
    %762 = vmatprep.subr.mxu0 0.0
    %763 = vmatpush1.msra.mxu0 0.0
    %764 = vmatprep.subr.mxu0 0.0
    %765 = vmatpush1.msra.mxu0 0.0
    %766 = vmatprep.subr.mxu0 0.0
    %767 = vmatpush1.msra.mxu0 0.0
    %768 = vmatprep.subr.mxu0 0.0
    %769 = vmatpush1.msra.mxu0 0.0
    %770 = vmatprep.subr.mxu0 0.0
    %771 = vmatpush1.msra.mxu0 0.0
    %772 = vmatprep.subr.mxu0 0.0
    %773 = vmatpush1.msra.mxu0 0.0
    %774 = vmatprep.subr.mxu0 0.0
    %775 = vmatpush1.msra.mxu0 0.0
    %776 = vmatprep.subr.mxu0 0.0
    %777 = vmatpush1.msra.mxu0 0.0
    %778 = vmatprep.subr.mxu0 0.0
    %779 = vmatpush1.msra.mxu0 0.0
    %780 = vmatprep.subr.mxu0 0.0
    %781 = vmatpush1.msra.mxu0 0.0
    %782 = vmatprep.subr.mxu0 0.0
    %783 = vmatpush1.msra.mxu0 0.0
    %784 = vmatprep.subr.mxu0 0.0
    %785 = vmatpush1.msra.mxu0 0.0
    %786 = vmatprep.subr.mxu0 0.0
    %787 = vmatpush1.msra.mxu0 0.0
    %788 = vmatprep.subr.mxu0 0.0
    %789 = vmatpush1.msra.mxu0 0.0
    %790 = vmatprep.mubr.f32.mxu0 0.0
    %791 = vmatmul.mubr.f32.gmra.mrb[0].mxu0 %v271
    %v792 = vpop.f32.mrb[0].mxu0
    %v793 = vadd.f32 0.0, %v792
    %v794 = vpop.f32.mrb[0].mxu0
    %795 = vmatprep.mubr.f32.mxu0 0.0
    %796 = vmatmul.mubr.f32.gmra.mrb[0].mxu0 %v274
    %v797 = vpop.f32.mrb[0].mxu0
    %v798 = vadd.f32 0.0, %v797
    %v799 = vpop.f32.mrb[0].mxu0
    %800 = vdwg.mxu0
    %801 = vmatprep.subr.mxu0 0.0
    %802 = vmatpush1.msra.mxu0 %v260
    %803 = vmatprep.subr.mxu0 0.0
    %804 = vmatpush1.msra.mxu0 %v265
    %805 = vmatprep.subr.mxu0 0.0
    %806 = vmatpush1.msra.mxu0 0.0
    %807 = vmatprep.subr.mxu0 0.0
    %808 = vmatpush1.msra.mxu0 0.0
    %809 = vmatprep.subr.mxu0 0.0
    %810 = vmatpush1.msra.mxu0 0.0
    %811 = vmatprep.subr.mxu0 0.0
    %812 = vmatpush1.msra.mxu0 0.0
    %813 = vmatprep.subr.mxu0 0.0
    %814 = vmatpush1.msra.mxu0 0.0
    %815 = vmatprep.subr.mxu0 0.0
    %816 = vmatpush1.msra.mxu0 0.0
    %817 = vmatprep.subr.mxu0 0.0
    %818 = vmatpush1.msra.mxu0 0.0
    %819 = vmatprep.subr.mxu0 0.0
    %820 = vmatpush1.msra.mxu0 0.0
    %821 = vmatprep.subr.mxu0 0.0
    %822 = vmatpush1.msra.mxu0 0.0
    %823 = vmatprep.subr.mxu0 0.0
    %824 = vmatpush1.msra.mxu0 0.0
    %825 = vmatprep.subr.mxu0 0.0
    %826 = vmatpush1.msra.mxu0 0.0
    %827 = vmatprep.subr.mxu0 0.0
    %828 = vmatpush1.msra.mxu0 0.0
    %829 = vmatprep.subr.mxu0 0.0
    %830 = vmatpush1.msra.mxu0 0.0
    %831 = vmatprep.subr.mxu0 0.0
    %832 = vmatpush1.msra.mxu0 0.0
    %833 = vmatprep.subr.mxu0 0.0
    %834 = vmatpush1.msra.mxu0 0.0
    %835 = vmatprep.subr.mxu0 0.0
    %836 = vmatpush1.msra.mxu0 0.0
    %837 = vmatprep.subr.mxu0 0.0
    %838 = vmatpush1.msra.mxu0 0.0
    %839 = vmatprep.subr.mxu0 0.0
    %840 = vmatpush1.msra.mxu0 0.0
    %841 = vmatprep.subr.mxu0 0.0
    %842 = vmatpush1.msra.mxu0 0.0
    %843 = vmatprep.subr.mxu0 0.0
    %844 = vmatpush1.msra.mxu0 0.0
    %845 = vmatprep.subr.mxu0 0.0
    %846 = vmatpush1.msra.mxu0 0.0
    %847 = vmatprep.subr.mxu0 0.0
    %848 = vmatpush1.msra.mxu0 0.0
    %849 = vmatprep.subr.mxu0 0.0
    %850 = vmatpush1.msra.mxu0 0.0
    %851 = vmatprep.subr.mxu0 0.0
    %852 = vmatpush1.msra.mxu0 0.0
    %853 = vmatprep.subr.mxu0 0.0
    %854 = vmatpush1.msra.mxu0 0.0
    %855 = vmatprep.subr.mxu0 0.0
    %856 = vmatpush1.msra.mxu0 0.0
    %857 = vmatprep.subr.mxu0 0.0
    %858 = vmatpush1.msra.mxu0 0.0
    %859 = vmatprep.subr.mxu0 0.0
    %860 = vmatpush1.msra.mxu0 0.0
    %861 = vmatprep.subr.mxu0 0.0
    %862 = vmatpush1.msra.mxu0 0.0
    %863 = vmatprep.subr.mxu0 0.0
    %864 = vmatpush1.msra.mxu0 0.0
    %865 = vmatprep.mubr.f32.mxu0 0.0
    %866 = vmatmul.mubr.f32.gmra.mrb[0].mxu0 %v271
    %v867 = vpop.f32.mrb[0].mxu0
    %v868 = vadd.f32 0.0, %v867
    %v869 = vpop.f32.mrb[0].mxu0
    %870 = vmatprep.mubr.f32.mxu0 0.0
    %871 = vmatmul.mubr.f32.gmra.mrb[0].mxu0 %v274
    %v872 = vpop.f32.mrb[0].mxu0
    %v873 = vadd.f32 0.0, %v872
    %v874 = vpop.f32.mrb[0].mxu0
    %875 = vdwg.mxu0
    %876 = vst.msk [vmem:[#allocation8] sm:$0xff] %vm74, %v343
    %877 = vst.msk [vmem:[#allocation8 + $0x8] sm:$0xff] %vm74, %v348
    %878 = vst.msk [vmem:[#allocation8 + $0x10] sm:$0xff] %vm74, %v418
    %879 = vst.msk [vmem:[#allocation8 + $0x18] sm:$0xff] %vm74, %v423
    %880 = vst.msk [vmem:[#allocation8 + $0x20] sm:$0xff] %vm74, %v493
    %881 = vst.msk [vmem:[#allocation8 + $0x28] sm:$0xff] %vm74, %v498
    %882 = vst.msk [vmem:[#allocation8 + $0x30] sm:$0xff] %vm74, %v568
    %883 = vst.msk [vmem:[#allocation8 + $0x38] sm:$0xff] %vm74, %v573
    %884 = vst.msk [vmem:[#allocation8 + $0x40] sm:$0xff] %vm74, %v643
    %885 = vst.msk [vmem:[#allocation8 + $0x48] sm:$0xff] %vm74, %v648
    %886 = vst.msk [vmem:[#allocation8 + $0x50] sm:$0xff] %vm74, %v718
    %887 = vst.msk [vmem:[#allocation8 + $0x58] sm:$0xff] %vm74, %v723
    %888 = vst.msk [vmem:[#allocation8 + $0x60] sm:$0xff] %vm74, %v793
    %889 = vst.msk [vmem:[#allocation8 + $0x68] sm:$0xff] %vm74, %v798
    %890 = vst.msk [vmem:[#allocation8 + $0x70] sm:$0xff] %vm74, %v868
    %891 = vst.msk [vmem:[#allocation8 + $0x78] sm:$0xff] %vm74, %v873
    // Predicated region
    $region26: #{dct2d.1} parent=1 // pred_check
      _
    $region27: #{dct2d.1} parent=1 // pred_check_branch
      %893 = sbr.rel (0) target = $region29
    $region28: #{dct2d.1} parent=1 // pred_region
      %s895 = ssub.s32 2048, 2048
      %896 = vsyncadd [#allocation4], %s895
      %s897 = sshll.u32 [#allocation8], 4
      %s898 = int_to_ptr.vmem [resolvable:$true] %s897
      %903 = dma.vmem_to_hbm [thread:$0]  %s898, 2048, %s3, [#allocation4], 128, 128, 8
    $region29: #{dct2d.1} parent=1 // pred_fallthru
      _
    // Predicated region
    $region30: #{dct2d.1} parent=1 // pred_check
      _
    $region31: #{dct2d.1} parent=1 // pred_check_branch
      %905 = sbr.rel (0) target = $region33
    $region32: #{dct2d.1} parent=1 // pred_region
      %906 = dma.done [#allocation4], 2048
    $region33: #{dct2d.1} parent=1 // pred_fallthru
      _
    %907 = vsyncpa [#allocation3], 1
    %908 = vsyncpa [#allocation6], 1
    %909 = vsyncpa [#allocation4], 1

</llo_original>
